<compile_context>
chip_gen: v7x
topology: tpu7x:2x2x1
jax: 0.10.0
libtpu: 0.0.40
codegen_flags: <defaults>
</compile_context>

<pallas_src>
import functools

import jax
import jax.numpy as jnp
from jax.experimental import pallas as pl
from jax.experimental.pallas import tpu as pltpu


def _round_up(x, m):
    return ((x + m - 1) // m) * m


def _contrast_kernel(anchor_ref, pos_ref, w1_ref, b1_ref, w2_ref, b2_ref, w_ref,
                     out_ref, *, n_valid_cols):
    a = anchor_ref[...]                                           # [TB, L]

    # Residual anchor MLP: relu(a @ W1 + b1) @ W2 + b2, then add a.
    hid = jnp.maximum(
        jnp.dot(a, w1_ref[...], preferred_element_type=jnp.float32) + b1_ref[...],
        0.0)
    mlp_out = (jnp.dot(hid, w2_ref[...], preferred_element_type=jnp.float32)
               + b2_ref[...])
    a_res = a + mlp_out                                           # [TB, L]

    # pred = anchor' @ W  (W passed pre-transposed to [in, out]).
    pred = jnp.dot(a_res, w_ref[...], preferred_element_type=jnp.float32)

    # logits = pred @ positive.T, contracting both last dims on the MXU.
    logits = jax.lax.dot_general(
        pred, pos_ref[...],
        dimension_numbers=(((1,), (1,)), ((), ())),
        preferred_element_type=jnp.float32)                       # [TB, Bp_pad]

    # Row-wise max over the *real* columns only (padded columns excluded).
    if n_valid_cols == logits.shape[1]:
        row_max = jnp.max(logits, axis=1, keepdims=True)
    else:
        col = jax.lax.broadcasted_iota(jnp.int32, logits.shape, 1)
        row_max = jnp.max(jnp.where(col < n_valid_cols, logits, -jnp.inf),
                          axis=1, keepdims=True)

    out_ref[...] = logits - row_max


@functools.partial(jax.jit, static_argnames=("block_rows",))
def contrast_forward(anchor, positive, params, block_rows=256):
    """anchor: [B, latent], positive: [B, latent].

    params = (w1 [L,H], b1 [H], w2 [H,L], b2 [L], w [L,L])  (all [in, out])."""
    w1, b1, w2, b2, w = params
    Ba, L = anchor.shape
    Bp = positive.shape[0]
    H = w1.shape[-1]

    # Batch tile for the grid: multiple of 8 (sublane), capped at block_rows.
    tb = min(block_rows, _round_up(Ba, 8))
    Ba_pad = _round_up(Ba, tb)
    anchor_p = anchor if Ba_pad == Ba else jnp.pad(
        anchor, ((0, Ba_pad - Ba), (0, 0)))

    # Pad positive rows to a lane multiple so the [TB, Bp_pad] output store is
    # lane-dense (unmasked vst).  Padded rows are zeros -> masked out of max.
    Bp_pad = _round_up(Bp, 128)
    positive_p = positive if Bp_pad == Bp else jnp.pad(
        positive, ((0, Bp_pad - Bp), (0, 0)))

    # 2-D biases for clean lane broadcast (constant-folds under jit).
    b1_2d = b1.reshape(1, H)
    b2_2d = b2.reshape(1, L)

    grid = (Ba_pad // tb,)
    row_spec = lambda shape: pl.BlockSpec(shape, lambda i: (i, 0))
    pinned = lambda shape: pl.BlockSpec(shape, lambda i: (0, 0))

    out = pl.pallas_call(
        functools.partial(_contrast_kernel, n_valid_cols=Bp),
        out_shape=jax.ShapeDtypeStruct((Ba_pad, Bp_pad), jnp.float32),
        grid=grid,
        in_specs=[
            row_spec((tb, L)),      # anchor rows, tiled over the grid
            pinned((Bp_pad, L)),    # positive (row-padded), VMEM-resident
            pinned((L, H)),         # W1
            pinned((1, H)),         # b1
            pinned((H, L)),         # W2
            pinned((1, L)),         # b2
            pinned((L, L)),         # W (contrast bilinear weight, pre-transposed)
        ],
        out_specs=row_spec((tb, Bp_pad)),
        compiler_params=pltpu.CompilerParams(
            dimension_semantics=("parallel",)),
    )(anchor_p, positive_p, w1, b1_2d, w2, b2_2d, w)

    return out[:Ba, :Bp]


def init_params(key, latent_size, hidden_size):
    """PyTorch-Linear-style uniform fan-in init; weights stored [in, out]."""
    k1, k2, k3, k4, k5 = jax.random.split(key, 5)
    bound1 = 1.0 / jnp.sqrt(latent_size)
    bound2 = 1.0 / jnp.sqrt(hidden_size)
    w1 = jax.random.uniform(k1, (latent_size, hidden_size), jnp.float32,
                            -bound1, bound1)
    b1 = jax.random.uniform(k2, (hidden_size,), jnp.float32, -bound1, bound1)
    w2 = jax.random.uniform(k3, (hidden_size, latent_size), jnp.float32,
                            -bound2, bound2)
    b2 = jax.random.uniform(k4, (latent_size,), jnp.float32, -bound2, bound2)
    w = jax.random.uniform(k5, (latent_size, latent_size), jnp.float32,
                           -bound1, bound1)
    return (w1, b1, w2, b2, w)


def reference_forward(anchor, positive, params):
    """Pure-JAX reference of the PyTorch ContrastModel forward pass."""
    w1, b1, w2, b2, w = params
    hid = jnp.maximum(anchor @ w1 + b1, 0.0)
    anchor_res = anchor + (hid @ w2 + b2)
    pred = anchor_res @ w
    logits = pred @ positive.T
    logits = logits - jnp.max(logits, axis=1, keepdims=True)
    return logits


if __name__ == "__main__":
    latent_size = 16
    hidden_size = 32
    B = 8

    key = jax.random.PRNGKey(0)
    kp, ka, kq = jax.random.split(key, 3)

    params = init_params(kp, latent_size, hidden_size)
    anchor = jax.random.normal(ka, (B, latent_size), jnp.float32)
    positive = jax.random.normal(kq, (B, latent_size), jnp.float32)

    logits = jax.block_until_ready(contrast_forward(anchor, positive, params))

    logits_ref = reference_forward(anchor, positive, params)
    assert logits.shape == (B, B)
    assert jnp.allclose(logits, logits_ref, atol=1e-5, rtol=1e-5)

    print("KERNEL_OK")
</pallas_src>

<mosaic_0001>
module attributes {stable_mosaic.version = 11 : i64} {
  func.func @_contrast_kernel(%arg0: i32, %arg1: memref<8x16xf32, #tpu.memory_space<vmem>>, %arg2: memref<128x16xf32, #tpu.memory_space<vmem>>, %arg3: memref<16x32xf32, #tpu.memory_space<vmem>>, %arg4: memref<1x32xf32, #tpu.memory_space<vmem>>, %arg5: memref<32x16xf32, #tpu.memory_space<vmem>>, %arg6: memref<1x16xf32, #tpu.memory_space<vmem>>, %arg7: memref<16x16xf32, #tpu.memory_space<vmem>>, %arg8: memref<8x128xf32, #tpu.memory_space<vmem>>) attributes {dimension_semantics = [#tpu.dimension_semantics<parallel>], iteration_bounds = array<i64: 1>, scalar_prefetch = 0 : i64, scratch_operands = 0 : i64, tpu.core_type = #tpu.core_type<tc>, window_params = [{transform_indices = @transform_0, window_bounds = array<i64: 8, 16>}, {pipeline_mode = #tpu.pipeline_mode<synchronous>, transform_indices = @transform_1, window_bounds = array<i64: 128, 16>}, {pipeline_mode = #tpu.pipeline_mode<synchronous>, transform_indices = @transform_2, window_bounds = array<i64: 16, 32>}, {pipeline_mode = #tpu.pipeline_mode<synchronous>, transform_indices = @transform_3, window_bounds = array<i64: 1, 32>}, {pipeline_mode = #tpu.pipeline_mode<synchronous>, transform_indices = @transform_4, window_bounds = array<i64: 32, 16>}, {pipeline_mode = #tpu.pipeline_mode<synchronous>, transform_indices = @transform_5, window_bounds = array<i64: 1, 16>}, {pipeline_mode = #tpu.pipeline_mode<synchronous>, transform_indices = @transform_6, window_bounds = array<i64: 16, 16>}, {transform_indices = @transform_7, window_bounds = array<i64: 8, 128>}]} {
    %c0 = arith.constant 0 : index
    %c0_0 = arith.constant 0 : index
    %0 = vector.load %arg1[%c0, %c0_0] : memref<8x16xf32, #tpu.memory_space<vmem>>, vector<8x16xf32>
    %c0_1 = arith.constant 0 : index
    %c0_2 = arith.constant 0 : index
    %1 = vector.load %arg3[%c0_1, %c0_2] : memref<16x32xf32, #tpu.memory_space<vmem>>, vector<16x32xf32>
    %cst = arith.constant dense<0.000000e+00> : vector<8x32xf32>
    %2 = tpu.matmul %0, %1, %cst {dimension_numbers = #tpu.dot_dimension_numbers<[1], [0], [0], [1], [0, 0, 1, 1], [], []>} : vector<8x16xf32>, vector<16x32xf32>, vector<8x32xf32> -> vector<8x32xf32>
    %c0_3 = arith.constant 0 : index
    %c0_4 = arith.constant 0 : index
    %3 = vector.load %arg4[%c0_3, %c0_4] : memref<1x32xf32, #tpu.memory_space<vmem>>, vector<1x32xf32>
    %4 = vector.broadcast %3 : vector<1x32xf32> to vector<8x32xf32>
    %5 = arith.addf %2, %4 : vector<8x32xf32>
    %cst_5 = arith.constant 0.000000e+00 : f32
    %6 = vector.broadcast %cst_5 : f32 to vector<8x32xf32>
    %7 = arith.maximumf %5, %6 : vector<8x32xf32>
    %c0_6 = arith.constant 0 : index
    %c0_7 = arith.constant 0 : index
    %8 = vector.load %arg5[%c0_6, %c0_7] : memref<32x16xf32, #tpu.memory_space<vmem>>, vector<32x16xf32>
    %cst_8 = arith.constant dense<0.000000e+00> : vector<8x16xf32>
    %9 = tpu.matmul %7, %8, %cst_8 {dimension_numbers = #tpu.dot_dimension_numbers<[1], [0], [0], [1], [0, 0, 1, 1], [], []>} : vector<8x32xf32>, vector<32x16xf32>, vector<8x16xf32> -> vector<8x16xf32>
    %c0_9 = arith.constant 0 : index
    %c0_10 = arith.constant 0 : index
    %10 = vector.load %arg6[%c0_9, %c0_10] : memref<1x16xf32, #tpu.memory_space<vmem>>, vector<1x16xf32>
    %11 = vector.broadcast %10 : vector<1x16xf32> to vector<8x16xf32>
    %12 = arith.addf %9, %11 : vector<8x16xf32>
    %13 = arith.addf %0, %12 : vector<8x16xf32>
    %c0_11 = arith.constant 0 : index
    %c0_12 = arith.constant 0 : index
    %14 = vector.load %arg7[%c0_11, %c0_12] : memref<16x16xf32, #tpu.memory_space<vmem>>, vector<16x16xf32>
    %cst_13 = arith.constant dense<0.000000e+00> : vector<8x16xf32>
    %15 = tpu.matmul %13, %14, %cst_13 {dimension_numbers = #tpu.dot_dimension_numbers<[1], [0], [0], [1], [0, 0, 1, 1], [], []>} : vector<8x16xf32>, vector<16x16xf32>, vector<8x16xf32> -> vector<8x16xf32>
    %c0_14 = arith.constant 0 : index
    %c0_15 = arith.constant 0 : index
    %16 = vector.load %arg2[%c0_14, %c0_15] : memref<128x16xf32, #tpu.memory_space<vmem>>, vector<128x16xf32>
    %cst_16 = arith.constant dense<0.000000e+00> : vector<8x128xf32>
    %17 = tpu.matmul %15, %16, %cst_16 {dimension_numbers = #tpu.dot_dimension_numbers<[1], [1], [0], [0], [0, 0, 1, 0], [], []>} : vector<8x16xf32>, vector<128x16xf32>, vector<8x128xf32> -> vector<8x128xf32>
    %18 = tpu.iota {dimensions = array<i32: 1>} : vector<8x128xi32>
    %c8_i32 = arith.constant 8 : i32
    %19 = vector.broadcast %c8_i32 : i32 to vector<8x128xi32>
    %20 = arith.cmpi slt, %18, %19 : vector<8x128xi32>
    %cst_17 = arith.constant 0xFF800000 : f32
    %21 = vector.broadcast %cst_17 : f32 to vector<8x128xf32>
    %22 = arith.select %20, %17, %21 : vector<8x128xi1>, vector<8x128xf32>
    %cst_18 = arith.constant dense<0xFF800000> : vector<8xf32>
    %23 = vector.multi_reduction <maximumf>, %22, %cst_18 [1] : vector<8x128xf32> to vector<8xf32>
    %24 = vector.shape_cast %23 : vector<8xf32> to vector<8x1xf32>
    %25 = vector.broadcast %24 : vector<8x1xf32> to vector<8x128xf32>
    %26 = arith.subf %17, %25 : vector<8x128xf32>
    %c0_19 = arith.constant 0 : index
    %c0_20 = arith.constant 0 : index
    %27 = vector.load %arg8[%c0_19, %c0_20] : memref<8x128xf32, #tpu.memory_space<vmem>>, vector<8x128xf32>
    tpu.vector_store %arg8[%c0_19, %c0_20], %26 {strides = array<i32>} : memref<8x128xf32, #tpu.memory_space<vmem>>, vector<8x128xf32>,
    return
  }
  func.func @transform_0(%arg0: i32) -> (i32, i32) {
    %c0_i32 = arith.constant 0 : i32
    %c0_i32_0 = arith.constant 0 : i32
    return %arg0, %c0_i32 : i32, i32
  }
  func.func @transform_1(%arg0: i32) -> (i32, i32) {
    %c0_i32 = arith.constant 0 : i32
    %c0_i32_0 = arith.constant 0 : i32
    %c0_i32_1 = arith.constant 0 : i32
    return %c0_i32, %c0_i32_0 : i32, i32
  }
  func.func @transform_2(%arg0: i32) -> (i32, i32) {
    %c0_i32 = arith.constant 0 : i32
    %c0_i32_0 = arith.constant 0 : i32
    %c0_i32_1 = arith.constant 0 : i32
    return %c0_i32, %c0_i32_0 : i32, i32
  }
  func.func @transform_3(%arg0: i32) -> (i32, i32) {
    %c0_i32 = arith.constant 0 : i32
    %c0_i32_0 = arith.constant 0 : i32
    %c0_i32_1 = arith.constant 0 : i32
    return %c0_i32, %c0_i32_0 : i32, i32
  }
  func.func @transform_4(%arg0: i32) -> (i32, i32) {
    %c0_i32 = arith.constant 0 : i32
    %c0_i32_0 = arith.constant 0 : i32
    %c0_i32_1 = arith.constant 0 : i32
    return %c0_i32, %c0_i32_0 : i32, i32
  }
  func.func @transform_5(%arg0: i32) -> (i32, i32) {
    %c0_i32 = arith.constant 0 : i32
    %c0_i32_0 = arith.constant 0 : i32
    %c0_i32_1 = arith.constant 0 : i32
    return %c0_i32, %c0_i32_0 : i32, i32
  }
  func.func @transform_6(%arg0: i32) -> (i32, i32) {
    %c0_i32 = arith.constant 0 : i32
    %c0_i32_0 = arith.constant 0 : i32
    %c0_i32_1 = arith.constant 0 : i32
    return %c0_i32, %c0_i32_0 : i32, i32
  }
  func.func @transform_7(%arg0: i32) -> (i32, i32) {
    %c0_i32 = arith.constant 0 : i32
    %c0_i32_0 = arith.constant 0 : i32
    return %arg0, %c0_i32 : i32, i32
  }
}

</mosaic_0001>

<llo_original>
// kernel: contrast_forward.1
$region0: #{contrast_forward.1}
  #allocation0 [shape = 'u32[]', space=smem, size = 0x4, offset = 0x4, fixed_abs, tag = 'smem constant byte address 0x4 - core index']
  #allocation1 [shape = 'u32[144,128]{1,0:T(1,128)}', space=vmem, size = 0x12000, scoped, tag = 'internal scratch']
  %s0 = inlined_call_operand.vmem [shape: f32[8,16], index: 0, kind: input, shape index: {}]
  %s1 = inlined_call_operand.vmem [shape: f32[128,16], index: 1, kind: input, shape index: {}]
  %s2 = inlined_call_operand.vmem [shape: f32[16,32], index: 2, kind: input, shape index: {}]
  %s3 = inlined_call_operand.vmem [shape: f32[1,32], index: 3, kind: input, shape index: {}]
  %s4 = inlined_call_operand.vmem [shape: f32[32,16], index: 4, kind: input, shape index: {}]
  %s5 = inlined_call_operand.vmem [shape: f32[1,16], index: 5, kind: input, shape index: {}]
  %s6 = inlined_call_operand.vmem [shape: f32[16,16], index: 6, kind: input, shape index: {}]
  %s7 = inlined_call_operand.hbm [shape: f32[8,128], index: 7, kind: output, shape index: {}]
  %s8 = sld [smem:[#allocation0]]
  $region38: #{contrast_forward.1} parent=0
    _
  %s10 = ssub.s32 1, %s8
  %s11 = scalar_select 0, %s10, %s8
  $region1: #{contrast_forward.1} parent=0
    #allocation2 [shape = 'u8[4096]{0}', space=vmem, size = 0x1000, scoped, tag = 'output window, operand 0, single buffered']
    #allocation3 [shape = 's32[1]{0}', space=sflag, size = 0x4, scoped, tag = 'scoped memory for contrast_forward.1']
    %12 = vsyncpa [#allocation3], 0
    // Predicated region
    $region2: #{contrast_forward.1} parent=1 // pred_check
      _
    $region3: #{contrast_forward.1} parent=1 // pred_check_branch
      %14 = sbr.rel (0) target = $region5
    $region4: #{contrast_forward.1} parent=1 // pred_region
      _
    $region5: #{contrast_forward.1} parent=1 // pred_fallthru
      _
    // Predicated region
    $region6: #{contrast_forward.1} parent=1 // pred_check
      _
    $region7: #{contrast_forward.1} parent=1 // pred_check_branch
      %16 = sbr.rel (0) target = $region9
    $region8: #{contrast_forward.1} parent=1 // pred_region
      _
    $region9: #{contrast_forward.1} parent=1 // pred_fallthru
      _
    // Predicated region
    $region10: #{contrast_forward.1} parent=1 // pred_check
      _
    $region11: #{contrast_forward.1} parent=1 // pred_check_branch
      %18 = sbr.rel (0) target = $region13
    $region12: #{contrast_forward.1} parent=1 // pred_region
      _
    $region13: #{contrast_forward.1} parent=1 // pred_fallthru
      _
    // Predicated region
    $region14: #{contrast_forward.1} parent=1 // pred_check
      _
    $region15: #{contrast_forward.1} parent=1 // pred_check_branch
      %20 = sbr.rel (0) target = $region17
    $region16: #{contrast_forward.1} parent=1 // pred_region
      _
    $region17: #{contrast_forward.1} parent=1 // pred_fallthru
      _
    // Predicated region
    $region18: #{contrast_forward.1} parent=1 // pred_check
      _
    $region19: #{contrast_forward.1} parent=1 // pred_check_branch
      %22 = sbr.rel (0) target = $region21
    $region20: #{contrast_forward.1} parent=1 // pred_region
      _
    $region21: #{contrast_forward.1} parent=1 // pred_fallthru
      _
    // Predicated region
    $region22: #{contrast_forward.1} parent=1 // pred_check
      _
    $region23: #{contrast_forward.1} parent=1 // pred_check_branch
      %24 = sbr.rel (0) target = $region25
    $region24: #{contrast_forward.1} parent=1 // pred_region
      _
    $region25: #{contrast_forward.1} parent=1 // pred_fallthru
      _
    // Predicated region
    $region26: #{contrast_forward.1} parent=1 // pred_check
      _
    $region27: #{contrast_forward.1} parent=1 // pred_check_branch
      %26 = sbr.rel (0) target = $region29
    $region28: #{contrast_forward.1} parent=1 // pred_region
      _
    $region29: #{contrast_forward.1} parent=1 // pred_fallthru
      _
    %v27 = vld [vmem:[%s0] sm:$0xff]
    %v28 = vld [vmem:[%s2] sm:$0xff]
    %v29 = vld [vmem:[%s2 + $0x8] sm:$0xff]
    %v30 = vld [vmem:[%s3] sm:$0x1]
    %v32 = vlaneseq
    %v33 = vshrl.u32 %v32, 7
    %v34 = vsub.s32 0, %v33
    %v35 = vrot.slane %v30, %v34
    %vm37 = vcmask 130048
    %v39 = vsel %vm37, %v27, 0
    %41 = vmatprep.subr.mxu0 0.0
    %42 = vmatpush1.msra.mxu0 %v28
    %43 = vmatprep.subr.mxu0 0.0
    %44 = vmatpush1.msra.mxu0 %v29
    %45 = vmatprep.subr.mxu0 0.0
    %46 = vmatpush1.msra.mxu0 0.0
    %47 = vmatprep.subr.mxu0 0.0
    %48 = vmatpush1.msra.mxu0 0.0
    %49 = vmatprep.subr.mxu0 0.0
    %50 = vmatpush1.msra.mxu0 0.0
    %51 = vmatprep.subr.mxu0 0.0
    %52 = vmatpush1.msra.mxu0 0.0
    %53 = vmatprep.subr.mxu0 0.0
    %54 = vmatpush1.msra.mxu0 0.0
    %55 = vmatprep.subr.mxu0 0.0
    %56 = vmatpush1.msra.mxu0 0.0
    %57 = vmatprep.subr.mxu0 0.0
    %58 = vmatpush1.msra.mxu0 0.0
    %59 = vmatprep.subr.mxu0 0.0
    %60 = vmatpush1.msra.mxu0 0.0
    %61 = vmatprep.subr.mxu0 0.0
    %62 = vmatpush1.msra.mxu0 0.0
    %63 = vmatprep.subr.mxu0 0.0
    %64 = vmatpush1.msra.mxu0 0.0
    %65 = vmatprep.subr.mxu0 0.0
    %66 = vmatpush1.msra.mxu0 0.0
    %67 = vmatprep.subr.mxu0 0.0
    %68 = vmatpush1.msra.mxu0 0.0
    %69 = vmatprep.subr.mxu0 0.0
    %70 = vmatpush1.msra.mxu0 0.0
    %71 = vmatprep.subr.mxu0 0.0
    %72 = vmatpush1.msra.mxu0 0.0
    %73 = vmatprep.subr.mxu0 0.0
    %74 = vmatpush1.msra.mxu0 0.0
    %75 = vmatprep.subr.mxu0 0.0
    %76 = vmatpush1.msra.mxu0 0.0
    %77 = vmatprep.subr.mxu0 0.0
    %78 = vmatpush1.msra.mxu0 0.0
    %79 = vmatprep.subr.mxu0 0.0
    %80 = vmatpush1.msra.mxu0 0.0
    %81 = vmatprep.subr.mxu0 0.0
    %82 = vmatpush1.msra.mxu0 0.0
    %83 = vmatprep.subr.mxu0 0.0
    %84 = vmatpush1.msra.mxu0 0.0
    %85 = vmatprep.subr.mxu0 0.0
    %86 = vmatpush1.msra.mxu0 0.0
    %87 = vmatprep.subr.mxu0 0.0
    %88 = vmatpush1.msra.mxu0 0.0
    %89 = vmatprep.subr.mxu0 0.0
    %90 = vmatpush1.msra.mxu0 0.0
    %91 = vmatprep.subr.mxu0 0.0
    %92 = vmatpush1.msra.mxu0 0.0
    %93 = vmatprep.subr.mxu0 0.0
    %94 = vmatpush1.msra.mxu0 0.0
    %95 = vmatprep.subr.mxu0 0.0
    %96 = vmatpush1.msra.mxu0 0.0
    %97 = vmatprep.subr.mxu0 0.0
    %98 = vmatpush1.msra.mxu0 0.0
    %99 = vmatprep.subr.mxu0 0.0
    %100 = vmatpush1.msra.mxu0 0.0
    %101 = vmatprep.subr.mxu0 0.0
    %102 = vmatpush1.msra.mxu0 0.0
    %103 = vmatprep.subr.mxu0 0.0
    %104 = vmatpush1.msra.mxu0 0.0
    %105 = vmatprep.mubr.f32.mxu0 0.0
    %106 = vmatmul.mubr.f32.gmra.mrb[0].mxu0 %v39
    %v107 = vpop.f32.mrb[0].mxu0
    %v108 = vadd.f32 %v35, %v107
    %v109 = vpop.f32.mrb[0].mxu0
    %110 = vdwg.mxu0
    %v111 = vmax.f32 %v108, 0.0
    %v112 = vld [vmem:[%s4] sm:$0xff]
    %v113 = vld [vmem:[%s4 + $0x8] sm:$0xff]
    %v114 = vld [vmem:[%s4 + $0x10] sm:$0xff]
    %v115 = vld [vmem:[%s4 + $0x18] sm:$0xff]
    %v116 = vld [vmem:[%s5] sm:$0x1]
    %v118 = vlaneseq
    %v119 = vshrl.u32 %v118, 7
    %v120 = vsub.s32 0, %v119
    %v121 = vrot.slane %v116, %v120
    %vm123 = vcmask 261120
    %v125 = vsel %vm123, %v111, 0
    %127 = vmatprep.subr.mxu0 0.0
    %128 = vmatpush1.msra.mxu0 %v112
    %129 = vmatprep.subr.mxu0 0.0
    %130 = vmatpush1.msra.mxu0 %v113
    %131 = vmatprep.subr.mxu0 0.0
    %132 = vmatpush1.msra.mxu0 %v114
    %133 = vmatprep.subr.mxu0 0.0
    %134 = vmatpush1.msra.mxu0 %v115
    %135 = vmatprep.subr.mxu0 0.0
    %136 = vmatpush1.msra.mxu0 0.0
    %137 = vmatprep.subr.mxu0 0.0
    %138 = vmatpush1.msra.mxu0 0.0
    %139 = vmatprep.subr.mxu0 0.0
    %140 = vmatpush1.msra.mxu0 0.0
    %141 = vmatprep.subr.mxu0 0.0
    %142 = vmatpush1.msra.mxu0 0.0
    %143 = vmatprep.subr.mxu0 0.0
    %144 = vmatpush1.msra.mxu0 0.0
    %145 = vmatprep.subr.mxu0 0.0
    %146 = vmatpush1.msra.mxu0 0.0
    %147 = vmatprep.subr.mxu0 0.0
    %148 = vmatpush1.msra.mxu0 0.0
    %149 = vmatprep.subr.mxu0 0.0
    %150 = vmatpush1.msra.mxu0 0.0
    %151 = vmatprep.subr.mxu0 0.0
    %152 = vmatpush1.msra.mxu0 0.0
    %153 = vmatprep.subr.mxu0 0.0
    %154 = vmatpush1.msra.mxu0 0.0
    %155 = vmatprep.subr.mxu0 0.0
    %156 = vmatpush1.msra.mxu0 0.0
    %157 = vmatprep.subr.mxu0 0.0
    %158 = vmatpush1.msra.mxu0 0.0
    %159 = vmatprep.subr.mxu0 0.0
    %160 = vmatpush1.msra.mxu0 0.0
    %161 = vmatprep.subr.mxu0 0.0
    %162 = vmatpush1.msra.mxu0 0.0
    %163 = vmatprep.subr.mxu0 0.0
    %164 = vmatpush1.msra.mxu0 0.0
    %165 = vmatprep.subr.mxu0 0.0
    %166 = vmatpush1.msra.mxu0 0.0
    %167 = vmatprep.subr.mxu0 0.0
    %168 = vmatpush1.msra.mxu0 0.0
    %169 = vmatprep.subr.mxu0 0.0
    %170 = vmatpush1.msra.mxu0 0.0
    %171 = vmatprep.subr.mxu0 0.0
    %172 = vmatpush1.msra.mxu0 0.0
    %173 = vmatprep.subr.mxu0 0.0
    %174 = vmatpush1.msra.mxu0 0.0
    %175 = vmatprep.subr.mxu0 0.0
    %176 = vmatpush1.msra.mxu0 0.0
    %177 = vmatprep.subr.mxu0 0.0
    %178 = vmatpush1.msra.mxu0 0.0
    %179 = vmatprep.subr.mxu0 0.0
    %180 = vmatpush1.msra.mxu0 0.0
    %181 = vmatprep.subr.mxu0 0.0
    %182 = vmatpush1.msra.mxu0 0.0
    %183 = vmatprep.subr.mxu0 0.0
    %184 = vmatpush1.msra.mxu0 0.0
    %185 = vmatprep.subr.mxu0 0.0
    %186 = vmatpush1.msra.mxu0 0.0
    %187 = vmatprep.subr.mxu0 0.0
    %188 = vmatpush1.msra.mxu0 0.0
    %189 = vmatprep.subr.mxu0 0.0
    %190 = vmatpush1.msra.mxu0 0.0
    %191 = vmatprep.mubr.f32.mxu0 0.0
    %192 = vmatmul.mubr.f32.gmra.mrb[0].mxu0 %v125
    %v193 = vpop.f32.mrb[0].mxu0
    %v194 = vadd.f32 %v121, %v193
    %v195 = vpop.f32.mrb[0].mxu0
    %196 = vdwg.mxu0
    %v197 = vadd.f32 %v27, %v194
    %v198 = vld [vmem:[%s6] sm:$0xff]
    %v199 = vld [vmem:[%s6 + $0x8] sm:$0xff]
    %v201 = vsel %vm37, %v197, 0
    %203 = vmatprep.subr.mxu0 0.0
    %204 = vmatpush1.msra.mxu0 %v198
    %205 = vmatprep.subr.mxu0 0.0
    %206 = vmatpush1.msra.mxu0 %v199
    %207 = vmatprep.subr.mxu0 0.0
    %208 = vmatpush1.msra.mxu0 0.0
    %209 = vmatprep.subr.mxu0 0.0
    %210 = vmatpush1.msra.mxu0 0.0
    %211 = vmatprep.subr.mxu0 0.0
    %212 = vmatpush1.msra.mxu0 0.0
    %213 = vmatprep.subr.mxu0 0.0
    %214 = vmatpush1.msra.mxu0 0.0
    %215 = vmatprep.subr.mxu0 0.0
    %216 = vmatpush1.msra.mxu0 0.0
    %217 = vmatprep.subr.mxu0 0.0
    %218 = vmatpush1.msra.mxu0 0.0
    %219 = vmatprep.subr.mxu0 0.0
    %220 = vmatpush1.msra.mxu0 0.0
    %221 = vmatprep.subr.mxu0 0.0
    %222 = vmatpush1.msra.mxu0 0.0
    %223 = vmatprep.subr.mxu0 0.0
    %224 = vmatpush1.msra.mxu0 0.0
    %225 = vmatprep.subr.mxu0 0.0
    %226 = vmatpush1.msra.mxu0 0.0
    %227 = vmatprep.subr.mxu0 0.0
    %228 = vmatpush1.msra.mxu0 0.0
    %229 = vmatprep.subr.mxu0 0.0
    %230 = vmatpush1.msra.mxu0 0.0
    %231 = vmatprep.subr.mxu0 0.0
    %232 = vmatpush1.msra.mxu0 0.0
    %233 = vmatprep.subr.mxu0 0.0
    %234 = vmatpush1.msra.mxu0 0.0
    %235 = vmatprep.subr.mxu0 0.0
    %236 = vmatpush1.msra.mxu0 0.0
    %237 = vmatprep.subr.mxu0 0.0
    %238 = vmatpush1.msra.mxu0 0.0
    %239 = vmatprep.subr.mxu0 0.0
    %240 = vmatpush1.msra.mxu0 0.0
    %241 = vmatprep.subr.mxu0 0.0
    %242 = vmatpush1.msra.mxu0 0.0
    %243 = vmatprep.subr.mxu0 0.0
    %244 = vmatpush1.msra.mxu0 0.0
    %245 = vmatprep.subr.mxu0 0.0
    %246 = vmatpush1.msra.mxu0 0.0
    %247 = vmatprep.subr.mxu0 0.0
    %248 = vmatpush1.msra.mxu0 0.0
    %249 = vmatprep.subr.mxu0 0.0
    %250 = vmatpush1.msra.mxu0 0.0
    %251 = vmatprep.subr.mxu0 0.0
    %252 = vmatpush1.msra.mxu0 0.0
    %253 = vmatprep.subr.mxu0 0.0
    %254 = vmatpush1.msra.mxu0 0.0
    %255 = vmatprep.subr.mxu0 0.0
    %256 = vmatpush1.msra.mxu0 0.0
    %257 = vmatprep.subr.mxu0 0.0
    %258 = vmatpush1.msra.mxu0 0.0
    %259 = vmatprep.subr.mxu0 0.0
    %260 = vmatpush1.msra.mxu0 0.0
    %261 = vmatprep.subr.mxu0 0.0
    %262 = vmatpush1.msra.mxu0 0.0
    %263 = vmatprep.subr.mxu0 0.0
    %264 = vmatpush1.msra.mxu0 0.0
    %265 = vmatprep.subr.mxu0 0.0
    %266 = vmatpush1.msra.mxu0 0.0
    %267 = vmatprep.mubr.f32.mxu0 0.0
    %268 = vmatmul.mubr.f32.gmra.mrb[0].mxu0 %v201
    %v269 = vpop.f32.mrb[0].mxu0
    %v270 = vadd.f32 0.0, %v269
    %v271 = vpop.f32.mrb[0].mxu0
    %272 = vdwg.mxu0
    %v273 = vld [vmem:[%s1] sm:$0xff]
    %v274 = vld [vmem:[%s1 + $0x8] sm:$0xff]
    %v275 = vld [vmem:[%s1 + $0x10] sm:$0xff]
    %v276 = vld [vmem:[%s1 + $0x18] sm:$0xff]
    %v277 = vld [vmem:[%s1 + $0x20] sm:$0xff]
    %v278 = vld [vmem:[%s1 + $0x28] sm:$0xff]
    %v279 = vld [vmem:[%s1 + $0x30] sm:$0xff]
    %v280 = vld [vmem:[%s1 + $0x38] sm:$0xff]
    %v281 = vld [vmem:[%s1 + $0x40] sm:$0xff]
    %v282 = vld [vmem:[%s1 + $0x48] sm:$0xff]
    %v283 = vld [vmem:[%s1 + $0x50] sm:$0xff]
    %v284 = vld [vmem:[%s1 + $0x58] sm:$0xff]
    %v285 = vld [vmem:[%s1 + $0x60] sm:$0xff]
    %v286 = vld [vmem:[%s1 + $0x68] sm:$0xff]
    %v287 = vld [vmem:[%s1 + $0x70] sm:$0xff]
    %v288 = vld [vmem:[%s1 + $0x78] sm:$0xff]
    %v290 = vsel %vm37, %v270, 0
    %v293 = vsel %vm37, %v273, 0
    %v296 = vsel %vm37, %v274, 0
    %v299 = vsel %vm37, %v275, 0
    %v302 = vsel %vm37, %v276, 0
    %v305 = vsel %vm37, %v277, 0
    %v308 = vsel %vm37, %v278, 0
    %v311 = vsel %vm37, %v279, 0
    %v314 = vsel %vm37, %v280, 0
    %v317 = vsel %vm37, %v281, 0
    %v320 = vsel %vm37, %v282, 0
    %v323 = vsel %vm37, %v283, 0
    %v326 = vsel %vm37, %v284, 0
    %v329 = vsel %vm37, %v285, 0
    %v332 = vsel %vm37, %v286, 0
    %v335 = vsel %vm37, %v287, 0
    %v338 = vsel %vm37, %v288, 0
    %340 = vmatprep.subr.mxu0 0.0
    %341 = vmatpush1.xpose.msra.mxu0 %v293
    %342 = vmatprep.subr.mxu0 0.0
    %343 = vmatpush1.xpose.msra.mxu0 %v296
    %344 = vmatprep.subr.mxu0 0.0
    %345 = vmatpush1.xpose.msra.mxu0 %v299
    %346 = vmatprep.subr.mxu0 0.0
    %347 = vmatpush1.xpose.msra.mxu0 %v302
    %348 = vmatprep.subr.mxu0 0.0
    %349 = vmatpush1.xpose.msra.mxu0 %v305
    %350 = vmatprep.subr.mxu0 0.0
    %351 = vmatpush1.xpose.msra.mxu0 %v308
    %352 = vmatprep.subr.mxu0 0.0
    %353 = vmatpush1.xpose.msra.mxu0 %v311
    %354 = vmatprep.subr.mxu0 0.0
    %355 = vmatpush1.xpose.msra.mxu0 %v314
    %356 = vmatprep.subr.mxu0 0.0
    %357 = vmatpush1.xpose.msra.mxu0 %v317
    %358 = vmatprep.subr.mxu0 0.0
    %359 = vmatpush1.xpose.msra.mxu0 %v320
    %360 = vmatprep.subr.mxu0 0.0
    %361 = vmatpush1.xpose.msra.mxu0 %v323
    %362 = vmatprep.subr.mxu0 0.0
    %363 = vmatpush1.xpose.msra.mxu0 %v326
    %364 = vmatprep.subr.mxu0 0.0
    %365 = vmatpush1.xpose.msra.mxu0 %v329
    %366 = vmatprep.subr.mxu0 0.0
    %367 = vmatpush1.xpose.msra.mxu0 %v332
    %368 = vmatprep.subr.mxu0 0.0
    %369 = vmatpush1.xpose.msra.mxu0 %v335
    %370 = vmatprep.subr.mxu0 0.0
    %371 = vmatpush1.xpose.msra.mxu0 %v338
    %372 = vmatprep.subr.mxu0 0.0
    %373 = vmatpush1.xpose.msra.mxu0 0.0
    %374 = vmatprep.subr.mxu0 0.0
    %375 = vmatpush1.xpose.msra.mxu0 0.0
    %376 = vmatprep.subr.mxu0 0.0
    %377 = vmatpush1.xpose.msra.mxu0 0.0
    %378 = vmatprep.subr.mxu0 0.0
    %379 = vmatpush1.xpose.msra.mxu0 0.0
    %380 = vmatprep.subr.mxu0 0.0
    %381 = vmatpush1.xpose.msra.mxu0 0.0
    %382 = vmatprep.subr.mxu0 0.0
    %383 = vmatpush1.xpose.msra.mxu0 0.0
    %384 = vmatprep.subr.mxu0 0.0
    %385 = vmatpush1.xpose.msra.mxu0 0.0
    %386 = vmatprep.subr.mxu0 0.0
    %387 = vmatpush1.xpose.msra.mxu0 0.0
    %388 = vmatprep.subr.mxu0 0.0
    %389 = vmatpush1.xpose.msra.mxu0 0.0
    %390 = vmatprep.subr.mxu0 0.0
    %391 = vmatpush1.xpose.msra.mxu0 0.0
    %392 = vmatprep.subr.mxu0 0.0
    %393 = vmatpush1.xpose.msra.mxu0 0.0
    %394 = vmatprep.subr.mxu0 0.0
    %395 = vmatpush1.xpose.msra.mxu0 0.0
    %396 = vmatprep.subr.mxu0 0.0
    %397 = vmatpush1.xpose.msra.mxu0 0.0
    %398 = vmatprep.subr.mxu0 0.0
    %399 = vmatpush1.xpose.msra.mxu0 0.0
    %400 = vmatprep.subr.mxu0 0.0
    %401 = vmatpush1.xpose.msra.mxu0 0.0
    %402 = vmatprep.subr.mxu0 0.0
    %403 = vmatpush1.xpose.msra.mxu0 0.0
    %404 = vmatprep.mubr.f32.mxu0 0.0
    %405 = vmatmul.mubr.f32.gmra.mrb[0].mxu0 %v290
    %v406 = vpop.f32.mrb[0].mxu0
    %v407 = vadd.f32 0.0, %v406
    %v408 = vpop.f32.mrb[0].mxu0
    %409 = vdwg.mxu0
    %v410 = vlaneseq
    %v411 = vand.u32 %v410, 127
    %vm412 = vcmp.lt.s32.totalorder %v411, 8
    %v413 = vsel %vm412, %v407, -inf
    %414 = vmax.xlane.f32.xlu0 %v413
    %v415 = vpop.xlane.xlu0 %414
    %v416 = vsub.f32 %v407, %v415
    %417 = vst [vmem:[#allocation2] sm:$0xff] %v416
    // Predicated region
    $region30: #{contrast_forward.1} parent=1 // pred_check
      _
    $region31: #{contrast_forward.1} parent=1 // pred_check_branch
      %419 = sbr.rel (0) target = $region33
    $region32: #{contrast_forward.1} parent=1 // pred_region
      %s421 = ssub.s32 128, 128
      %422 = vsyncadd [#allocation3], %s421
      %s424 = sshll.u32 [#allocation2], 4
      %s425 = int_to_ptr.vmem [resolvable:$true] %s424
      %427 = dma.vmem_to_hbm [thread:$0]  %s425, 128, %s7, [#allocation3]
    $region33: #{contrast_forward.1} parent=1 // pred_fallthru
      _
    // Predicated region
    $region34: #{contrast_forward.1} parent=1 // pred_check
      _
    $region35: #{contrast_forward.1} parent=1 // pred_check_branch
      %429 = sbr.rel (0) target = $region37
    $region36: #{contrast_forward.1} parent=1 // pred_region
      %430 = dma.done [#allocation3], 128
    $region37: #{contrast_forward.1} parent=1 // pred_fallthru
      _
    %431 = vsyncpa [#allocation3], 1

</llo_original>
